<compile_context>
chip_gen: v7x
topology: tpu7x:2x2x1
jax: 0.10.0
libtpu: 0.0.40
codegen_flags: <defaults>
</compile_context>

<pallas_src>
import functools

import jax
import jax.numpy as jnp
from jax.experimental import pallas as pl
from jax.experimental.pallas import tpu as pltpu


def _ntm_kernel(z_ref, m_ref, wcat_ref, bg_ref, out_ref, *, read_heads):
    # z_ref    : (TB, D)        queries for this batch tile
    # m_ref    : (TB, N, D)     memory for this batch tile (dominant HBM stream)
    # wcat_ref : (D, R*D + R)   fused [key | gate] projection (pre-transposed)
    # bg_ref   : (1, R)         gate bias
    # out_ref  : (TB, D)        mean-over-heads read vector
    f32 = jnp.float32
    tb, d = out_ref.shape
    r = read_heads

    z = z_ref[...].astype(f32)                       # (TB, D)
    m = m_ref[...].astype(f32)                       # (TB, N, D)

    # Inverse L2 norm of every memory row, kept lane-dense as (TB, N).
    # The normalized memory itself is never materialized (sim is scaled instead).
    inv_m = jax.lax.rsqrt(jnp.sum(m * m, axis=-1))   # (TB, N), EUP rsqrt

    # One fused full-width MXU matmul: keys for all heads AND the gate logits.
    #   proj[:, h*D:(h+1)*D] = k_h ,  proj[:, R*D:] = gate logits
    proj = jnp.dot(z, wcat_ref[...], preferred_element_type=f32)   # (TB, R*D + R)
    g = jnp.exp(proj[:, r * d:] + bg_ref[...])                     # (TB, R)

    inv_r = jnp.float32(1.0 / r)                     # mean over heads as a multiply
    acc = jnp.zeros((tb, d), dtype=f32)
    for h in range(r):                               # static, tiny head loop; all ops TB-batched
        k_h = proj[:, h * d:(h + 1) * d]             # (TB, D) static lane slice
        k_n = k_h * jax.lax.rsqrt(jnp.sum(k_h * k_h, axis=-1, keepdims=True))

        # Cosine similarity with every slot.  The contraction uses the known-good
        # batched einsum form (q = 1) and is squeezed to (TB, N) right away so the
        # softmax path below is fully sublane- and lane-dense.
        sim = jnp.einsum("bqd,bnd->bqn", k_n[:, None, :], m,
                         preferred_element_type=f32)[:, 0, :] * inv_m   # (TB, N)

        # softmax over slots (lane axis); approx reciprocal on the EUP — the
        # per-row scale error cancels in the second softmax below.
        e1 = jnp.exp(sim - jnp.max(sim, axis=-1, keepdims=True))
        w1 = e1 * pl.reciprocal(jnp.sum(e1, axis=-1, keepdims=True), approx=True)

        # gate-sharpened re-softmax: softmax(g_h * log(1e-5 + w1)) over slots.
        lg = g[:, h:h + 1] * jnp.log(1e-5 + w1)      # (TB, 1) broadcast over N
        e2 = jnp.exp(lg - jnp.max(lg, axis=-1, keepdims=True))
        w2 = e2 / jnp.sum(e2, axis=-1, keepdims=True)                  # (TB, N)

        # Read vector for head h.
        acc = acc + jnp.einsum("bqn,bnd->bqd", w2[:, None, :], m,
                               preferred_element_type=f32)[:, 0, :]

    out_ref[...] = (acc * inv_r).astype(out_ref.dtype)


def _tpu_vmem_bytes():
    """Physical per-core VMEM; conservative (v7x-sized) fallback if unqueryable."""
    try:
        return int(pltpu.get_tpu_info().vmem_capacity_bytes)
    except Exception:
        return 64 * 1024 * 1024


def _pick_batch_tile(B, N, D, R, *, small_vmem):
    """Largest sublane-aligned batch tile fitting a generation-aware VMEM budget.

    Accounts for what is actually resident per grid step:
      * 2 pipeline buffers of the (TB, N, D) memory block + ~1 in-kernel f32 temp
        (m*m for the row norms); the normalized memory is never materialized,
      * double-buffered (TB, D) z / out blocks and the (TB, R*D+R) projection,
      * per-head (TB, N) softmax temporaries,
      * the double-buffered replicated weights (subtracted from the budget).
    """
    budget = (24 if small_vmem else 56) * 1024 * 1024
    # TODO(synk): single-buffer the replicated weights (pipeline_mode=pl.Buffered(1)
    # or memory_space=pl.ANY + one-time scratch copy) to reclaim half of this.
    weight_bytes = 2 * 4 * (D * (R * D + R) + R)
    avail = max(budget - weight_bytes, 1 << 20)
    per_row = 4 * (3 * N * D + 4 * D + 2 * (R * D + R) + 6 * N)
    tb = int(min(avail // per_row, 1024, B))
    if B <= 8:
        return B                                   # full-dim block (exempt from 8-div rule)
    if small_vmem:
        # v7x-like part: keep >= 2 batch tiles so both TensorCores get work.
        tb = min(tb, ((-(-B // 2)) + 7) // 8 * 8)
    return max(8, (tb // 8) * 8)


def ntm_forward(x, z, M, wk, wg, bg, *, read_heads):
    """Pallas implementation of NTM.forward(x, z) with memory M.

    x   : unused (kept for parity with the PyTorch forward signature)
    z   : (B, D) float32
    M   : (B, N, D) float32
    wk  : (R*D, D) float32   -- out_k.weight (torch Linear layout)
    wg  : (R, D)   float32   -- out_g.weight
    bg  : (R,)     float32   -- out_g.bias
    returns: (B, D) float32
    """
    del x  # the reference forward ignores it
    B, N, D = M.shape
    R = read_heads

    # torch Linear:  k_flat = z @ wk.T  (column h*D + d is head h, dim d)
    #                g_logit = z @ wg.T + bg
    # Fuse both projections into one (D, R*D + R) RHS so the kernel runs a single
    # full-width MXU matmul instead of R skinny per-head ones plus a gate matmul.
    wcat = jnp.concatenate([wk.T, wg.T], axis=1).astype(jnp.float32)   # (D, R*D + R)
    bg2 = bg.reshape(1, R).astype(jnp.float32)

    small_vmem = _tpu_vmem_bytes() <= 64 * 1024 * 1024   # v7x-like (64 MiB / TC)
    TB = _pick_batch_tile(B, N, D, R, small_vmem=small_vmem)
    grid = (pl.cdiv(B, TB),)

    kernel = functools.partial(_ntm_kernel, read_heads=R)

    out = pl.pallas_call(
        kernel,
        out_shape=jax.ShapeDtypeStruct((B, D), z.dtype),
        grid_spec=pltpu.PrefetchScalarGridSpec(
            num_scalar_prefetch=0,
            grid=grid,
            in_specs=[
                pl.BlockSpec((TB, D), lambda b: (b, 0)),          # z (streamed)
                pl.BlockSpec((TB, N, D), lambda b: (b, 0, 0)),    # M (streamed, dominant)
                pl.BlockSpec((D, R * D + R), lambda b: (0, 0)),   # fused weights (fetched once)
                pl.BlockSpec((1, R), lambda b: (0, 0)),           # gate bias (fetched once)
            ],
            out_specs=pl.BlockSpec((TB, D), lambda b: (b, 0)),
        ),
        compiler_params=pltpu.CompilerParams(
            dimension_semantics=("parallel",),   # batch tiles independent (v7x: 2 TCs)
            vmem_limit_bytes=(48 if small_vmem else 96) * 1024 * 1024,
        ),
    )(z, M, wcat, bg2)
    return out


def ntm_reference(z, M, wk, wg, bg, *, read_heads):
    """Pure-JAX reference mirroring the PyTorch forward exactly."""
    B, N, D = M.shape
    R = read_heads
    k = (z @ wk.T).reshape(B, R, D)
    g = jnp.exp(z @ wg.T + bg)[:, None, :]                          # (B, 1, R)
    Mn = M / jnp.linalg.norm(M, axis=-1, keepdims=True)
    kn = k / jnp.linalg.norm(k, axis=-1, keepdims=True)
    sim = jnp.einsum("bnd,brd->bnr", Mn, kn)                        # (B, N, R)
    w = jax.nn.softmax(sim, axis=1)
    w = jax.nn.softmax(g * jnp.log(1e-5 + w), axis=1)
    r = jnp.einsum("bnr,bnd->brd", w, M)                            # (B, R, D)
    return jnp.mean(r, axis=1)                                      # (B, D)


if __name__ == "__main__":
    def run_case(B, N, D, R):
        key = jax.random.PRNGKey(0)
        kx, kz, kM, kwk, kwg, kbg = jax.random.split(key, 6)

        x = jax.random.normal(kx, (B, D), dtype=jnp.float32)   # unused by forward
        z = jax.random.normal(kz, (B, D), dtype=jnp.float32)
        M = jax.random.normal(kM, (B, N, D), dtype=jnp.float32)

        # Parameters (shapes from NTM.__init__); small random init to actually
        # exercise the projections (the module's eye/zeros init is degenerate).
        wk = 0.1 * jax.random.normal(kwk, (R * D, D), dtype=jnp.float32)  # out_k.weight
        wg = 0.1 * jax.random.normal(kwg, (R, D), dtype=jnp.float32)      # out_g.weight
        bg = 0.1 * jax.random.normal(kbg, (R,), dtype=jnp.float32)        # out_g.bias

        out = jax.block_until_ready(ntm_forward(x, z, M, wk, wg, bg, read_heads=R))
        ref = ntm_reference(z, M, wk, wg, bg, read_heads=R)
        assert out.shape == (B, D)
        assert jnp.allclose(out, ref, atol=1e-3, rtol=1e-3), (
            f"max abs diff = {jnp.max(jnp.abs(out - ref))}"
        )

    run_case(B=2, N=16, D=32, R=1)   # module default (read_heads=1)
    run_case(B=4, N=16, D=32, R=2)   # exercises the multi-head path
    print("KERNEL_OK")
</pallas_src>

<mosaic_0001>
module attributes {stable_mosaic.version = 11 : i64} {
  func.func @_ntm_kernel(%arg0: i32, %arg1: memref<2x32xf32, #tpu.memory_space<vmem>>, %arg2: memref<2x16x32xf32, #tpu.memory_space<vmem>>, %arg3: memref<32x33xf32, #tpu.memory_space<vmem>>, %arg4: memref<1x1xf32, #tpu.memory_space<vmem>>, %arg5: memref<2x32xf32, #tpu.memory_space<vmem>>) attributes {dimension_semantics = [#tpu.dimension_semantics<parallel>], iteration_bounds = array<i64: 1>, scalar_prefetch = 0 : i64, scratch_operands = 0 : i64, tpu.core_type = #tpu.core_type<tc>, window_params = [{transform_indices = @transform_0, window_bounds = array<i64: 2, 32>}, {transform_indices = @transform_1, window_bounds = array<i64: 2, 16, 32>}, {pipeline_mode = #tpu.pipeline_mode<synchronous>, transform_indices = @transform_2, window_bounds = array<i64: 32, 33>}, {pipeline_mode = #tpu.pipeline_mode<synchronous>, transform_indices = @transform_3, window_bounds = array<i64: 1, 1>}, {transform_indices = @transform_4, window_bounds = array<i64: 2, 32>}]} {
    %c0 = arith.constant 0 : index
    %c0_0 = arith.constant 0 : index
    %0 = vector.load %arg1[%c0, %c0_0] : memref<2x32xf32, #tpu.memory_space<vmem>>, vector<2x32xf32>
    %c0_1 = arith.constant 0 : index
    %c0_2 = arith.constant 0 : index
    %c0_3 = arith.constant 0 : index
    %1 = vector.load %arg2[%c0_1, %c0_2, %c0_3] : memref<2x16x32xf32, #tpu.memory_space<vmem>>, vector<2x16x32xf32>
    %2 = arith.mulf %1, %1 : vector<2x16x32xf32>
    %cst = arith.constant dense<0.000000e+00> : vector<2x16xf32>
    %3 = vector.multi_reduction <add>, %2, %cst [2] : vector<2x16x32xf32> to vector<2x16xf32>
    %4 = math.rsqrt %3 : vector<2x16xf32>
    %c0_4 = arith.constant 0 : index
    %c0_5 = arith.constant 0 : index
    %5 = vector.load %arg3[%c0_4, %c0_5] : memref<32x33xf32, #tpu.memory_space<vmem>>, vector<32x33xf32>
    %cst_6 = arith.constant dense<0.000000e+00> : vector<2x33xf32>
    %6 = tpu.matmul %0, %5, %cst_6 {dimension_numbers = #tpu.dot_dimension_numbers<[1], [0], [0], [1], [0, 0, 1, 1], [], []>} : vector<2x32xf32>, vector<32x33xf32>, vector<2x33xf32> -> vector<2x33xf32>
    %7 = vector.extract_strided_slice %6 {offsets = [0, 32], sizes = [2, 1], strides = [1, 1]} : vector<2x33xf32> to vector<2x1xf32>
    %c0_7 = arith.constant 0 : index
    %c0_8 = arith.constant 0 : index
    %8 = vector.load %arg4[%c0_7, %c0_8] : memref<1x1xf32, #tpu.memory_space<vmem>>, vector<1x1xf32>
    %9 = vector.broadcast %8 : vector<1x1xf32> to vector<2x1xf32>
    %10 = arith.addf %7, %9 : vector<2x1xf32>
    %11 = math.exp %10 : vector<2x1xf32>
    %cst_9 = arith.constant 0.000000e+00 : f32
    %12 = vector.broadcast %cst_9 : f32 to vector<2x32xf32>
    %13 = vector.extract_strided_slice %6 {offsets = [0, 0], sizes = [2, 32], strides = [1, 1]} : vector<2x33xf32> to vector<2x32xf32>
    %14 = arith.mulf %13, %13 : vector<2x32xf32>
    %cst_10 = arith.constant dense<0.000000e+00> : vector<2xf32>
    %15 = vector.multi_reduction <add>, %14, %cst_10 [1] : vector<2x32xf32> to vector<2xf32>
    %16 = vector.shape_cast %15 : vector<2xf32> to vector<2x1xf32>
    %17 = math.rsqrt %16 : vector<2x1xf32>
    %18 = vector.broadcast %17 : vector<2x1xf32> to vector<2x32xf32>
    %19 = arith.mulf %13, %18 : vector<2x32xf32>
    %20 = vector.shape_cast %19 : vector<2x32xf32> to vector<2x1x32xf32>
    "tpu.trace_start"() <{level = 10 : i32, message = "bqd,bnd->bqn"}> : () -> ()
    %cst_11 = arith.constant dense<0.000000e+00> : vector<2x1x16xf32>
    %21 = tpu.matmul %20, %1, %cst_11 {dimension_numbers = #tpu.dot_dimension_numbers<[2], [2], [1], [1], [0, 0, 0, 1, 1, 1], [0], [0]>} : vector<2x1x32xf32>, vector<2x16x32xf32>, vector<2x1x16xf32> -> vector<2x1x16xf32>
    "tpu.trace_stop"() : () -> ()
    %22 = vector.shape_cast %21 : vector<2x1x16xf32> to vector<2x16xf32>
    %23 = arith.mulf %22, %4 : vector<2x16xf32>
    %cst_12 = arith.constant dense<0xFF800000> : vector<2xf32>
    %24 = vector.multi_reduction <maximumf>, %23, %cst_12 [1] : vector<2x16xf32> to vector<2xf32>
    %25 = vector.shape_cast %24 : vector<2xf32> to vector<2x1xf32>
    %26 = vector.broadcast %25 : vector<2x1xf32> to vector<2x16xf32>
    %27 = arith.subf %23, %26 : vector<2x16xf32>
    %28 = math.exp %27 : vector<2x16xf32>
    %cst_13 = arith.constant dense<0.000000e+00> : vector<2xf32>
    %29 = vector.multi_reduction <add>, %28, %cst_13 [1] : vector<2x16xf32> to vector<2xf32>
    %30 = vector.shape_cast %29 : vector<2xf32> to vector<2x1xf32>
    %31 = tpu.reciprocal %30 {approx = true} : vector<2x1xf32> -> vector<2x1xf32>
    %32 = vector.broadcast %31 : vector<2x1xf32> to vector<2x16xf32>
    %33 = arith.mulf %28, %32 : vector<2x16xf32>
    %cst_14 = arith.constant 9.99999974E-6 : f32
    %34 = vector.broadcast %cst_14 : f32 to vector<2x16xf32>
    %35 = arith.addf %34, %33 : vector<2x16xf32>
    %36 = math.log %35 : vector<2x16xf32>
    %37 = vector.broadcast %11 : vector<2x1xf32> to vector<2x16xf32>
    %38 = arith.mulf %37, %36 : vector<2x16xf32>
    %cst_15 = arith.constant dense<0xFF800000> : vector<2xf32>
    %39 = vector.multi_reduction <maximumf>, %38, %cst_15 [1] : vector<2x16xf32> to vector<2xf32>
    %40 = vector.shape_cast %39 : vector<2xf32> to vector<2x1xf32>
    %41 = vector.broadcast %40 : vector<2x1xf32> to vector<2x16xf32>
    %42 = arith.subf %38, %41 : vector<2x16xf32>
    %43 = math.exp %42 : vector<2x16xf32>
    %cst_16 = arith.constant dense<0.000000e+00> : vector<2xf32>
    %44 = vector.multi_reduction <add>, %43, %cst_16 [1] : vector<2x16xf32> to vector<2xf32>
    %45 = vector.shape_cast %44 : vector<2xf32> to vector<2x1xf32>
    %46 = vector.broadcast %45 : vector<2x1xf32> to vector<2x16xf32>
    %47 = arith.divf %43, %46 : vector<2x16xf32>
    %48 = vector.shape_cast %47 : vector<2x16xf32> to vector<2x1x16xf32>
    "tpu.trace_start"() <{level = 10 : i32, message = "bqn,bnd->bqd"}> : () -> ()
    %cst_17 = arith.constant dense<0.000000e+00> : vector<2x1x32xf32>
    %49 = tpu.matmul %48, %1, %cst_17 {dimension_numbers = #tpu.dot_dimension_numbers<[2], [1], [1], [2], [0, 0, 0, 1, 1, 2], [0], [0]>} : vector<2x1x16xf32>, vector<2x16x32xf32>, vector<2x1x32xf32> -> vector<2x1x32xf32>
    "tpu.trace_stop"() : () -> ()
    %50 = vector.shape_cast %49 : vector<2x1x32xf32> to vector<2x32xf32>
    %51 = arith.addf %12, %50 : vector<2x32xf32>
    %cst_18 = arith.constant 1.000000e+00 : f32
    %52 = vector.broadcast %cst_18 : f32 to vector<2x32xf32>
    %53 = arith.mulf %51, %52 : vector<2x32xf32>
    %c0_19 = arith.constant 0 : index
    %c0_20 = arith.constant 0 : index
    %54 = vector.load %arg5[%c0_19, %c0_20] : memref<2x32xf32, #tpu.memory_space<vmem>>, vector<2x32xf32>
    tpu.vector_store %arg5[%c0_19, %c0_20], %53 {strides = array<i32>} : memref<2x32xf32, #tpu.memory_space<vmem>>, vector<2x32xf32>,
    return
  }
  func.func @transform_0(%arg0: i32) -> (i32, i32) {
    %c0_i32 = arith.constant 0 : i32
    %c0_i32_0 = arith.constant 0 : i32
    return %arg0, %c0_i32 : i32, i32
  }
  func.func @transform_1(%arg0: i32) -> (i32, i32, i32) {
    %c0_i32 = arith.constant 0 : i32
    %c0_i32_0 = arith.constant 0 : i32
    %c0_i32_1 = arith.constant 0 : i32
    return %arg0, %c0_i32, %c0_i32_0 : i32, i32, i32
  }
  func.func @transform_2(%arg0: i32) -> (i32, i32) {
    %c0_i32 = arith.constant 0 : i32
    %c0_i32_0 = arith.constant 0 : i32
    %c0_i32_1 = arith.constant 0 : i32
    return %c0_i32, %c0_i32_0 : i32, i32
  }
  func.func @transform_3(%arg0: i32) -> (i32, i32) {
    %c0_i32 = arith.constant 0 : i32
    %c0_i32_0 = arith.constant 0 : i32
    %c0_i32_1 = arith.constant 0 : i32
    return %c0_i32, %c0_i32_0 : i32, i32
  }
  func.func @transform_4(%arg0: i32) -> (i32, i32) {
    %c0_i32 = arith.constant 0 : i32
    %c0_i32_0 = arith.constant 0 : i32
    return %arg0, %c0_i32 : i32, i32
  }
}

</mosaic_0001>

<llo_original>
// kernel: tpu_custom_call.1
$region0: #{tpu_custom_call.1}
  #allocation0 [shape = 'u32[]', space=smem, size = 0x4, offset = 0x4, fixed_abs, tag = 'smem constant byte address 0x4 - core index']
  #allocation1 [shape = 'u32[144,128]{1,0:T(1,128)}', space=vmem, size = 0x12000, scoped, tag = 'internal scratch']
  #allocation2 [shape = 'f32[1,1]{1,0:T(1,128)S(1)}', space=vmem, size = 0x200, scoped, tag = 'scoped memory for tpu_custom_call.1']
  %s0 = inlined_call_operand.vmem [shape: f32[2,32], index: 0, kind: input, shape index: {}]
  %s1 = inlined_call_operand.hbm [shape: f32[2,16,32], index: 1, kind: input, shape index: {}]
  %s2 = inlined_call_operand.hbm [shape: f32[32,33], index: 2, kind: input, shape index: {}]
  %s3 = inlined_call_operand.<no memory space> [shape: f32[1,1], index: 3, kind: input, shape index: {}]
  %s4 = inlined_call_operand.hbm [shape: f32[2,32], index: 4, kind: output, shape index: {}]
  %s5 = sld [smem:[#allocation0]]
  $region34: #{tpu_custom_call.1} parent=0
    _
  %s7 = ssub.s32 1, %s5
  %s8 = scalar_select 0, %s7, %s5
  %v9 = vstv %s3
  %10 = vst [vmem:[#allocation2] sm:$0x1] %v9
  $region1: #{tpu_custom_call.1} parent=0
    #allocation3 [shape = 'u8[16384]{0}', space=vmem, size = 0x4000, scoped, tag = 'input window, operand 1, single buffered']
    #allocation4 [shape = 's32[1]{0}', space=sflag, size = 0x4, scoped, tag = 'scoped memory for tpu_custom_call.1']
    #allocation5 [shape = 's32[1]{0}', space=sflag, size = 0x4, scoped, tag = 'scoped memory for tpu_custom_call.1']
    #allocation6 [shape = 'u8[16384]{0}', space=vmem, size = 0x4000, scoped, tag = 'input window, operand 2, single buffered']
    #allocation7 [shape = 's32[1]{0}', space=sflag, size = 0x4, scoped, tag = 'scoped memory for tpu_custom_call.1']
    #allocation8 [shape = 'u8[1024]{0}', space=vmem, size = 0x400, scoped, tag = 'output window, operand 0, single buffered']
    %11 = vsyncpa [#allocation4], 0
    %12 = vsyncpa [#allocation7], 0
    %13 = vsyncpa [#allocation5], 0
    // Predicated region
    $region2: #{tpu_custom_call.1} parent=1 // pred_check
      _
    $region3: #{tpu_custom_call.1} parent=1 // pred_check_branch
      %15 = sbr.rel (0) target = $region5
    $region4: #{tpu_custom_call.1} parent=1 // pred_region
      _
    $region5: #{tpu_custom_call.1} parent=1 // pred_fallthru
      _
    // Predicated region
    $region6: #{tpu_custom_call.1} parent=1 // pred_check
      _
    $region7: #{tpu_custom_call.1} parent=1 // pred_check_branch
      %17 = sbr.rel (0) target = $region9
    $region8: #{tpu_custom_call.1} parent=1 // pred_region
      %s19 = ssub.s32 512, 512
      %20 = vsyncadd [#allocation4], %s19
      %s21 = sshll.u32 [#allocation3], 4
      %s22 = int_to_ptr.vmem [resolvable:$true] %s21
      %27 = dma.hbm_to_vmem [thread:$0]  %s1, 512, %s22, [#allocation4], 128, 128, 8
    $region9: #{tpu_custom_call.1} parent=1 // pred_fallthru
      _
    // Predicated region
    $region10: #{tpu_custom_call.1} parent=1 // pred_check
      _
    $region11: #{tpu_custom_call.1} parent=1 // pred_check_branch
      %29 = sbr.rel (0) target = $region13
    $region12: #{tpu_custom_call.1} parent=1 // pred_region
      %s31 = ssub.s32 512, 512
      %32 = vsyncadd [#allocation7], %s31
      %s33 = sshll.u32 [#allocation6], 4
      %s34 = int_to_ptr.vmem [resolvable:$true] %s33
      %39 = dma.hbm_to_vmem [thread:$0]  %s2, 512, %s34, [#allocation7], 128, 128, 8
    $region13: #{tpu_custom_call.1} parent=1 // pred_fallthru
      _
    // Predicated region
    $region14: #{tpu_custom_call.1} parent=1 // pred_check
      _
    $region15: #{tpu_custom_call.1} parent=1 // pred_check_branch
      %41 = sbr.rel (0) target = $region17
    $region16: #{tpu_custom_call.1} parent=1 // pred_region
      _
    $region17: #{tpu_custom_call.1} parent=1 // pred_fallthru
      _
    // Predicated region
    $region18: #{tpu_custom_call.1} parent=1 // pred_check
      _
    $region19: #{tpu_custom_call.1} parent=1 // pred_check_branch
      %43 = sbr.rel (0) target = $region21
    $region20: #{tpu_custom_call.1} parent=1 // pred_region
      %44 = dma.done [#allocation4], 512
    $region21: #{tpu_custom_call.1} parent=1 // pred_fallthru
      _
    // Predicated region
    $region22: #{tpu_custom_call.1} parent=1 // pred_check
      _
    $region23: #{tpu_custom_call.1} parent=1 // pred_check_branch
      %46 = sbr.rel (0) target = $region25
    $region24: #{tpu_custom_call.1} parent=1 // pred_region
      %47 = dma.done [#allocation7], 512
    $region25: #{tpu_custom_call.1} parent=1 // pred_fallthru
      _
    %v48 = vld [vmem:[%s0] sm:$0x3]
    %v49 = vld [vmem:[#allocation3] sm:$0xff]
    %v50 = vld [vmem:[#allocation3 + $0x8] sm:$0xff]
    %v51 = vld [vmem:[#allocation3 + $0x10] sm:$0xff]
    %v52 = vld [vmem:[#allocation3 + $0x18] sm:$0xff]
    %v53 = vmul.f32 %v49, %v49
    %v54 = vmul.f32 %v50, %v50
    %v55 = vmul.f32 %v51, %v51
    %v56 = vmul.f32 %v52, %v52
    %vm57 = vcmask 261120
    %v58 = vsel %vm57, %v53, 0.0
    %59 = vadd.xlane.f32.xlu0 %v58
    %v60 = vpop.xlane.xlu0 %59
    %v61 = vsel %vm57, %v54, 0.0
    %62 = vadd.xlane.f32.xlu0 %v61
    %v63 = vpop.xlane.xlu0 %62
    %v64 = vsel %vm57, %v55, 0.0
    %65 = vadd.xlane.f32.xlu0 %v64
    %v66 = vpop.xlane.xlu0 %65
    %v67 = vsel %vm57, %v56, 0.0
    %68 = vadd.xlane.f32.xlu0 %v67
    %v69 = vpop.xlane.xlu0 %68
    %v70 = vrsqrt.pop %v60
    %v71 = vrsqrt.pop %v63
    %v72 = vrsqrt.pop %v66
    %v73 = vrsqrt.pop %v69
    %v74 = vld [vmem:[#allocation6] sm:$0xff]
    %v75 = vld [vmem:[#allocation6 + $0x8] sm:$0xff]
    %v76 = vld [vmem:[#allocation6 + $0x10] sm:$0xff]
    %v77 = vld [vmem:[#allocation6 + $0x18] sm:$0xff]
    %v79 = vsel %vm57, %v48, 0
    %81 = vmatprep.subr.mxu0 0.0
    %82 = vmatpush1.msra.mxu0 %v74
    %83 = vmatprep.subr.mxu0 0.0
    %84 = vmatpush1.msra.mxu0 %v75
    %85 = vmatprep.subr.mxu0 0.0
    %86 = vmatpush1.msra.mxu0 %v76
    %87 = vmatprep.subr.mxu0 0.0
    %88 = vmatpush1.msra.mxu0 %v77
    %89 = vmatprep.subr.mxu0 0.0
    %90 = vmatpush1.msra.mxu0 0.0
    %91 = vmatprep.subr.mxu0 0.0
    %92 = vmatpush1.msra.mxu0 0.0
    %93 = vmatprep.subr.mxu0 0.0
    %94 = vmatpush1.msra.mxu0 0.0
    %95 = vmatprep.subr.mxu0 0.0
    %96 = vmatpush1.msra.mxu0 0.0
    %97 = vmatprep.subr.mxu0 0.0
    %98 = vmatpush1.msra.mxu0 0.0
    %99 = vmatprep.subr.mxu0 0.0
    %100 = vmatpush1.msra.mxu0 0.0
    %101 = vmatprep.subr.mxu0 0.0
    %102 = vmatpush1.msra.mxu0 0.0
    %103 = vmatprep.subr.mxu0 0.0
    %104 = vmatpush1.msra.mxu0 0.0
    %105 = vmatprep.subr.mxu0 0.0
    %106 = vmatpush1.msra.mxu0 0.0
    %107 = vmatprep.subr.mxu0 0.0
    %108 = vmatpush1.msra.mxu0 0.0
    %109 = vmatprep.subr.mxu0 0.0
    %110 = vmatpush1.msra.mxu0 0.0
    %111 = vmatprep.subr.mxu0 0.0
    %112 = vmatpush1.msra.mxu0 0.0
    %113 = vmatprep.subr.mxu0 0.0
    %114 = vmatpush1.msra.mxu0 0.0
    %115 = vmatprep.subr.mxu0 0.0
    %116 = vmatpush1.msra.mxu0 0.0
    %117 = vmatprep.subr.mxu0 0.0
    %118 = vmatpush1.msra.mxu0 0.0
    %119 = vmatprep.subr.mxu0 0.0
    %120 = vmatpush1.msra.mxu0 0.0
    %121 = vmatprep.subr.mxu0 0.0
    %122 = vmatpush1.msra.mxu0 0.0
    %123 = vmatprep.subr.mxu0 0.0
    %124 = vmatpush1.msra.mxu0 0.0
    %125 = vmatprep.subr.mxu0 0.0
    %126 = vmatpush1.msra.mxu0 0.0
    %127 = vmatprep.subr.mxu0 0.0
    %128 = vmatpush1.msra.mxu0 0.0
    %129 = vmatprep.subr.mxu0 0.0
    %130 = vmatpush1.msra.mxu0 0.0
    %131 = vmatprep.subr.mxu0 0.0
    %132 = vmatpush1.msra.mxu0 0.0
    %133 = vmatprep.subr.mxu0 0.0
    %134 = vmatpush1.msra.mxu0 0.0
    %135 = vmatprep.subr.mxu0 0.0
    %136 = vmatpush1.msra.mxu0 0.0
    %137 = vmatprep.subr.mxu0 0.0
    %138 = vmatpush1.msra.mxu0 0.0
    %139 = vmatprep.subr.mxu0 0.0
    %140 = vmatpush1.msra.mxu0 0.0
    %141 = vmatprep.subr.mxu0 0.0
    %142 = vmatpush1.msra.mxu0 0.0
    %143 = vmatprep.subr.mxu0 0.0
    %144 = vmatpush1.msra.mxu0 0.0
    %145 = vmatprep.mubr.f32.mxu0 0.0
    %146 = vmatmul.mubr.f32.gmra.mrb[0].mxu0 %v79
    %v147 = vpop.f32.mrb[0].mxu0
    %v148 = vadd.f32 0.0, %v147
    %v149 = vpop.f32.mrb[0].mxu0
    %150 = vdwg.mxu0
    %v151 = vld [vmem:[#allocation2] sm:$0x1]
    %v153 = vlaneseq
    %v154 = vshrl.u32 %v153, 7
    %v155 = vsub.s32 0, %v154
    %v156 = vrot.slane %v151, %v155
    %157 = vrot.lane.b32.xlu0 %v156, 32
    %v158 = vpop.permute.xlu0 %157
    %v160 = vadd.f32 %v148, %v158
    %v161 = vmul.f32 %v160, 1.442695
    %v162 = vpow.pop %v161
    %v163 = vmul.f32 %v148, %v148
    %vm164 = vcmask 254976
    %v165 = vsel %vm164, %v163, 0.0
    %166 = vadd.xlane.f32.xlu0 %v165
    %v167 = vpop.xlane.xlu0 %166
    %v168 = vrsqrt.pop %v167
    %v169 = vmul.f32 %v148, %v168
    %v172 = vunpack.c.l.s4 1966171168
    %v173 = vunpack.c.0.s8 %v172
    %v174 = vlaneseq
    %v175 = vshrl.u32 %v174, 7
    %v176 = vsub.s32 %v173, %v175
    %v177 = vrot.slane %v169, %v176
    %v178 = vcombine.high %v177, %v177
    %v180 = vunpack.c.l.s4 1966171168
    %v181 = vunpack.c.0.s8 %v180
    %v182 = vlaneseq
    %v183 = vshrl.u32 %v182, 7
    %v184 = vsub.s32 %v181, %v183
    %v185 = vrot.slane %v177, %v184
    %v187 = vunpack.c.l.s4 1966171168
    %v188 = vunpack.c.0.s8 %v187
    %v189 = vlaneseq
    %v190 = vshrl.u32 %v189, 7
    %v191 = vsub.s32 %v188, %v190
    %v192 = vrot.slane %v178, %v191
    %v193 = vsel %vm57, %v185, 0
    %v196 = vsel %vm57, %v49, 0
    %v199 = vsel %vm57, %v50, 0
    %201 = vmatprep.subr.mxu0 0.0
    %202 = vmatpush1.xpose.msra.mxu0 %v196
    %203 = vmatprep.subr.mxu0 0.0
    %204 = vmatpush1.xpose.msra.mxu0 %v199
    %205 = vmatprep.subr.mxu0 0.0
    %206 = vmatpush1.xpose.msra.mxu0 0.0
    %207 = vmatprep.subr.mxu0 0.0
    %208 = vmatpush1.xpose.msra.mxu0 0.0
    %209 = vmatprep.subr.mxu0 0.0
    %210 = vmatpush1.xpose.msra.mxu0 0.0
    %211 = vmatprep.subr.mxu0 0.0
    %212 = vmatpush1.xpose.msra.mxu0 0.0
    %213 = vmatprep.subr.mxu0 0.0
    %214 = vmatpush1.xpose.msra.mxu0 0.0
    %215 = vmatprep.subr.mxu0 0.0
    %216 = vmatpush1.xpose.msra.mxu0 0.0
    %217 = vmatprep.subr.mxu0 0.0
    %218 = vmatpush1.xpose.msra.mxu0 0.0
    %219 = vmatprep.subr.mxu0 0.0
    %220 = vmatpush1.xpose.msra.mxu0 0.0
    %221 = vmatprep.subr.mxu0 0.0
    %222 = vmatpush1.xpose.msra.mxu0 0.0
    %223 = vmatprep.subr.mxu0 0.0
    %224 = vmatpush1.xpose.msra.mxu0 0.0
    %225 = vmatprep.subr.mxu0 0.0
    %226 = vmatpush1.xpose.msra.mxu0 0.0
    %227 = vmatprep.subr.mxu0 0.0
    %228 = vmatpush1.xpose.msra.mxu0 0.0
    %229 = vmatprep.subr.mxu0 0.0
    %230 = vmatpush1.xpose.msra.mxu0 0.0
    %231 = vmatprep.subr.mxu0 0.0
    %232 = vmatpush1.xpose.msra.mxu0 0.0
    %233 = vmatprep.subr.mxu0 0.0
    %234 = vmatpush1.xpose.msra.mxu0 0.0
    %235 = vmatprep.subr.mxu0 0.0
    %236 = vmatpush1.xpose.msra.mxu0 0.0
    %237 = vmatprep.subr.mxu0 0.0
    %238 = vmatpush1.xpose.msra.mxu0 0.0
    %239 = vmatprep.subr.mxu0 0.0
    %240 = vmatpush1.xpose.msra.mxu0 0.0
    %241 = vmatprep.subr.mxu0 0.0
    %242 = vmatpush1.xpose.msra.mxu0 0.0
    %243 = vmatprep.subr.mxu0 0.0
    %244 = vmatpush1.xpose.msra.mxu0 0.0
    %245 = vmatprep.subr.mxu0 0.0
    %246 = vmatpush1.xpose.msra.mxu0 0.0
    %247 = vmatprep.subr.mxu0 0.0
    %248 = vmatpush1.xpose.msra.mxu0 0.0
    %249 = vmatprep.subr.mxu0 0.0
    %250 = vmatpush1.xpose.msra.mxu0 0.0
    %251 = vmatprep.subr.mxu0 0.0
    %252 = vmatpush1.xpose.msra.mxu0 0.0
    %253 = vmatprep.subr.mxu0 0.0
    %254 = vmatpush1.xpose.msra.mxu0 0.0
    %255 = vmatprep.subr.mxu0 0.0
    %256 = vmatpush1.xpose.msra.mxu0 0.0
    %257 = vmatprep.subr.mxu0 0.0
    %258 = vmatpush1.xpose.msra.mxu0 0.0
    %259 = vmatprep.subr.mxu0 0.0
    %260 = vmatpush1.xpose.msra.mxu0 0.0
    %261 = vmatprep.subr.mxu0 0.0
    %262 = vmatpush1.xpose.msra.mxu0 0.0
    %263 = vmatprep.subr.mxu0 0.0
    %264 = vmatpush1.xpose.msra.mxu0 0.0
    %265 = vmatprep.mubr.f32.mxu0 0.0
    %266 = vmatmul.mubr.f32.gmra.mrb[0].mxu0 %v193
    %v267 = vpop.f32.mrb[0].mxu0
    %v268 = vadd.f32 0.0, %v267
    %v269 = vpop.f32.mrb[0].mxu0
    %270 = vdwg.mxu0
    %v271 = vsel %vm57, %v192, 0
    %v274 = vsel %vm57, %v51, 0
    %v277 = vsel %vm57, %v52, 0
    %279 = vmatprep.subr.mxu0 0.0
    %280 = vmatpush1.xpose.msra.mxu0 %v274
    %281 = vmatprep.subr.mxu0 0.0
    %282 = vmatpush1.xpose.msra.mxu0 %v277
    %283 = vmatprep.subr.mxu0 0.0
    %284 = vmatpush1.xpose.msra.mxu0 0.0
    %285 = vmatprep.subr.mxu0 0.0
    %286 = vmatpush1.xpose.msra.mxu0 0.0
    %287 = vmatprep.subr.mxu0 0.0
    %288 = vmatpush1.xpose.msra.mxu0 0.0
    %289 = vmatprep.subr.mxu0 0.0
    %290 = vmatpush1.xpose.msra.mxu0 0.0
    %291 = vmatprep.subr.mxu0 0.0
    %292 = vmatpush1.xpose.msra.mxu0 0.0
    %293 = vmatprep.subr.mxu0 0.0
    %294 = vmatpush1.xpose.msra.mxu0 0.0
    %295 = vmatprep.subr.mxu0 0.0
    %296 = vmatpush1.xpose.msra.mxu0 0.0
    %297 = vmatprep.subr.mxu0 0.0
    %298 = vmatpush1.xpose.msra.mxu0 0.0
    %299 = vmatprep.subr.mxu0 0.0
    %300 = vmatpush1.xpose.msra.mxu0 0.0
    %301 = vmatprep.subr.mxu0 0.0
    %302 = vmatpush1.xpose.msra.mxu0 0.0
    %303 = vmatprep.subr.mxu0 0.0
    %304 = vmatpush1.xpose.msra.mxu0 0.0
    %305 = vmatprep.subr.mxu0 0.0
    %306 = vmatpush1.xpose.msra.mxu0 0.0
    %307 = vmatprep.subr.mxu0 0.0
    %308 = vmatpush1.xpose.msra.mxu0 0.0
    %309 = vmatprep.subr.mxu0 0.0
    %310 = vmatpush1.xpose.msra.mxu0 0.0
    %311 = vmatprep.subr.mxu0 0.0
    %312 = vmatpush1.xpose.msra.mxu0 0.0
    %313 = vmatprep.subr.mxu0 0.0
    %314 = vmatpush1.xpose.msra.mxu0 0.0
    %315 = vmatprep.subr.mxu0 0.0
    %316 = vmatpush1.xpose.msra.mxu0 0.0
    %317 = vmatprep.subr.mxu0 0.0
    %318 = vmatpush1.xpose.msra.mxu0 0.0
    %319 = vmatprep.subr.mxu0 0.0
    %320 = vmatpush1.xpose.msra.mxu0 0.0
    %321 = vmatprep.subr.mxu0 0.0
    %322 = vmatpush1.xpose.msra.mxu0 0.0
    %323 = vmatprep.subr.mxu0 0.0
    %324 = vmatpush1.xpose.msra.mxu0 0.0
    %325 = vmatprep.subr.mxu0 0.0
    %326 = vmatpush1.xpose.msra.mxu0 0.0
    %327 = vmatprep.subr.mxu0 0.0
    %328 = vmatpush1.xpose.msra.mxu0 0.0
    %329 = vmatprep.subr.mxu0 0.0
    %330 = vmatpush1.xpose.msra.mxu0 0.0
    %331 = vmatprep.subr.mxu0 0.0
    %332 = vmatpush1.xpose.msra.mxu0 0.0
    %333 = vmatprep.subr.mxu0 0.0
    %334 = vmatpush1.xpose.msra.mxu0 0.0
    %335 = vmatprep.subr.mxu0 0.0
    %336 = vmatpush1.xpose.msra.mxu0 0.0
    %337 = vmatprep.subr.mxu0 0.0
    %338 = vmatpush1.xpose.msra.mxu0 0.0
    %339 = vmatprep.subr.mxu0 0.0
    %340 = vmatpush1.xpose.msra.mxu0 0.0
    %341 = vmatprep.subr.mxu0 0.0
    %342 = vmatpush1.xpose.msra.mxu0 0.0
    %343 = vmatprep.mubr.f32.mxu0 0.0
    %344 = vmatmul.mubr.f32.gmra.mrb[0].mxu0 %v271
    %v345 = vpop.f32.mrb[0].mxu0
    %v346 = vadd.f32 0.0, %v345
    %v347 = vpop.f32.mrb[0].mxu0
    %348 = vdwg.mxu0
    %v353 = vlaneseq
    %v354 = vand.u32 %v353, 127
    %v355 = vlaneseq
    %v356 = vshrl.u32 %v355, 7
    %v357 = vsub.s32 %v354, %v356
    %v358 = vrot.slane %v70, %v357
    %v359 = vadd.s32 %v354, 4294967288
    %v360 = vlaneseq
    %v361 = vshrl.u32 %v360, 7
    %v362 = vsub.s32 %v359, %v361
    %v363 = vrot.slane %v71, %v362
    %vm364 = vcmask 130112
    %v365 = vsel %vm364, %v363, %v358
    %v366 = vlaneseq
    %v367 = vshrl.u32 %v366, 7
    %v368 = vsub.s32 %v354, %v367
    %v369 = vrot.slane %v72, %v368
    %v370 = vlaneseq
    %v371 = vshrl.u32 %v370, 7
    %v372 = vsub.s32 %v359, %v371
    %v373 = vrot.slane %v73, %v372
    %v374 = vsel %vm364, %v373, %v369
    %v377 = vmul.f32 %v268, %v365
    %v378 = vmul.f32 %v346, %v374
    %v381 = vrot.slane %v378, 7
    %vm382 = vcmask 1041409
    %v383 = vsel %vm382, %v381, %v377
    %vm385 = vcmask 123904
    %v386 = vsel %vm385, %v383, -inf
    %387 = vmax.xlane.f32.xlu0 %v386
    %v388 = vpop.xlane.xlu0 %387
    %v390 = vrot.slane %v388, 1
    %v393 = vsub.f32 %v377, %v388
    %v394 = vsub.f32 %v378, %v390
    %v395 = vmul.f32 %v393, 1.442695
    %v396 = vpow.pop %v395
    %v397 = vmul.f32 %v394, 1.442695
    %v398 = vpow.pop %v397
    %v401 = vrot.slane %v398, 7
    %v402 = vsel %vm382, %v401, %v396
    %v404 = vsel %vm385, %v402, 0.0
    %405 = vadd.xlane.f32.xlu0 %v404
    %v406 = vpop.xlane.xlu0 %405
    %v407 = vrcp.pop %v406
    %v409 = vrot.slane %v407, 1
    %v412 = vmul.f32 %v396, %v407
    %v413 = vmul.f32 %v398, %v409
    %v414 = vadd.f32 %v412, 1e-05
    %v415 = vadd.f32 %v413, 1e-05
    %v416 = vlog2.pop %v414
    %v417 = vmul.f32 %v416, 0.6931472
    %v418 = vlog2.pop %v415
    %v419 = vmul.f32 %v418, 0.6931472
    %421 = vset.pattern.permute.xlu0 32
    %422 = vperm.xlu0 %421, %v162
    %v423 = vpop.permute.xlu0 %422
    %v427 = vrot.slane %v419, 7
    %v428 = vsel %vm382, %v427, %v417
    %v430 = vmul.f32 %v423, %v428
    %v431 = vsel %vm385, %v430, -inf
    %432 = vmax.xlane.f32.xlu0 %v431
    %v433 = vpop.xlane.xlu0 %432
    %v434 = vsub.f32 %v430, %v433
    %v435 = vmul.f32 %v434, 1.442695
    %v436 = vpow.pop %v435
    %v437 = vsel %vm385, %v436, 0.0
    %438 = vadd.xlane.f32.xlu0 %v437
    %v439 = vpop.xlane.xlu0 %438
    %v440 = vrcp.pop %v439
    %v441 = vmul.f32 %v436, %v440
    %v444 = vunpack.c.l.s4 1966171168
    %v445 = vunpack.c.0.s8 %v444
    %v446 = vlaneseq
    %v447 = vshrl.u32 %v446, 7
    %v448 = vsub.s32 %v445, %v447
    %v449 = vrot.slane %v441, %v448
    %v450 = vcombine.high %v449, %v449
    %v452 = vunpack.c.l.s4 1966171168
    %v453 = vunpack.c.0.s8 %v452
    %v454 = vlaneseq
    %v455 = vshrl.u32 %v454, 7
    %v456 = vsub.s32 %v453, %v455
    %v457 = vrot.slane %v449, %v456
    %v459 = vunpack.c.l.s4 1966171168
    %v460 = vunpack.c.0.s8 %v459
    %v461 = vlaneseq
    %v462 = vshrl.u32 %v461, 7
    %v463 = vsub.s32 %v460, %v462
    %v464 = vrot.slane %v450, %v463
    %vm465 = vcmask 130048
    %v466 = vsel %vm465, %v457, 0
    %468 = vmatprep.subr.mxu0 0.0
    %469 = vmatpush1.msra.mxu0 %v49
    %470 = vmatprep.subr.mxu0 0.0
    %471 = vmatpush1.msra.mxu0 %v50
    %472 = vmatprep.subr.mxu0 0.0
    %473 = vmatpush1.msra.mxu0 0.0
    %474 = vmatprep.subr.mxu0 0.0
    %475 = vmatpush1.msra.mxu0 0.0
    %476 = vmatprep.subr.mxu0 0.0
    %477 = vmatpush1.msra.mxu0 0.0
    %478 = vmatprep.subr.mxu0 0.0
    %479 = vmatpush1.msra.mxu0 0.0
    %480 = vmatprep.subr.mxu0 0.0
    %481 = vmatpush1.msra.mxu0 0.0
    %482 = vmatprep.subr.mxu0 0.0
    %483 = vmatpush1.msra.mxu0 0.0
    %484 = vmatprep.subr.mxu0 0.0
    %485 = vmatpush1.msra.mxu0 0.0
    %486 = vmatprep.subr.mxu0 0.0
    %487 = vmatpush1.msra.mxu0 0.0
    %488 = vmatprep.subr.mxu0 0.0
    %489 = vmatpush1.msra.mxu0 0.0
    %490 = vmatprep.subr.mxu0 0.0
    %491 = vmatpush1.msra.mxu0 0.0
    %492 = vmatprep.subr.mxu0 0.0
    %493 = vmatpush1.msra.mxu0 0.0
    %494 = vmatprep.subr.mxu0 0.0
    %495 = vmatpush1.msra.mxu0 0.0
    %496 = vmatprep.subr.mxu0 0.0
    %497 = vmatpush1.msra.mxu0 0.0
    %498 = vmatprep.subr.mxu0 0.0
    %499 = vmatpush1.msra.mxu0 0.0
    %500 = vmatprep.subr.mxu0 0.0
    %501 = vmatpush1.msra.mxu0 0.0
    %502 = vmatprep.subr.mxu0 0.0
    %503 = vmatpush1.msra.mxu0 0.0
    %504 = vmatprep.subr.mxu0 0.0
    %505 = vmatpush1.msra.mxu0 0.0
    %506 = vmatprep.subr.mxu0 0.0
    %507 = vmatpush1.msra.mxu0 0.0
    %508 = vmatprep.subr.mxu0 0.0
    %509 = vmatpush1.msra.mxu0 0.0
    %510 = vmatprep.subr.mxu0 0.0
    %511 = vmatpush1.msra.mxu0 0.0
    %512 = vmatprep.subr.mxu0 0.0
    %513 = vmatpush1.msra.mxu0 0.0
    %514 = vmatprep.subr.mxu0 0.0
    %515 = vmatpush1.msra.mxu0 0.0
    %516 = vmatprep.subr.mxu0 0.0
    %517 = vmatpush1.msra.mxu0 0.0
    %518 = vmatprep.subr.mxu0 0.0
    %519 = vmatpush1.msra.mxu0 0.0
    %520 = vmatprep.subr.mxu0 0.0
    %521 = vmatpush1.msra.mxu0 0.0
    %522 = vmatprep.subr.mxu0 0.0
    %523 = vmatpush1.msra.mxu0 0.0
    %524 = vmatprep.subr.mxu0 0.0
    %525 = vmatpush1.msra.mxu0 0.0
    %526 = vmatprep.subr.mxu0 0.0
    %527 = vmatpush1.msra.mxu0 0.0
    %528 = vmatprep.subr.mxu0 0.0
    %529 = vmatpush1.msra.mxu0 0.0
    %530 = vmatprep.subr.mxu0 0.0
    %531 = vmatpush1.msra.mxu0 0.0
    %532 = vmatprep.mubr.f32.mxu0 0.0
    %533 = vmatmul.mubr.f32.gmra.mrb[0].mxu0 %v466
    %v534 = vpop.f32.mrb[0].mxu0
    %v535 = vadd.f32 0.0, %v534
    %v536 = vpop.f32.mrb[0].mxu0
    %537 = vdwg.mxu0
    %v538 = vsel %vm465, %v464, 0
    %540 = vmatprep.subr.mxu0 0.0
    %541 = vmatpush1.msra.mxu0 %v51
    %542 = vmatprep.subr.mxu0 0.0
    %543 = vmatpush1.msra.mxu0 %v52
    %544 = vmatprep.subr.mxu0 0.0
    %545 = vmatpush1.msra.mxu0 0.0
    %546 = vmatprep.subr.mxu0 0.0
    %547 = vmatpush1.msra.mxu0 0.0
    %548 = vmatprep.subr.mxu0 0.0
    %549 = vmatpush1.msra.mxu0 0.0
    %550 = vmatprep.subr.mxu0 0.0
    %551 = vmatpush1.msra.mxu0 0.0
    %552 = vmatprep.subr.mxu0 0.0
    %553 = vmatpush1.msra.mxu0 0.0
    %554 = vmatprep.subr.mxu0 0.0
    %555 = vmatpush1.msra.mxu0 0.0
    %556 = vmatprep.subr.mxu0 0.0
    %557 = vmatpush1.msra.mxu0 0.0
    %558 = vmatprep.subr.mxu0 0.0
    %559 = vmatpush1.msra.mxu0 0.0
    %560 = vmatprep.subr.mxu0 0.0
    %561 = vmatpush1.msra.mxu0 0.0
    %562 = vmatprep.subr.mxu0 0.0
    %563 = vmatpush1.msra.mxu0 0.0
    %564 = vmatprep.subr.mxu0 0.0
    %565 = vmatpush1.msra.mxu0 0.0
    %566 = vmatprep.subr.mxu0 0.0
    %567 = vmatpush1.msra.mxu0 0.0
    %568 = vmatprep.subr.mxu0 0.0
    %569 = vmatpush1.msra.mxu0 0.0
    %570 = vmatprep.subr.mxu0 0.0
    %571 = vmatpush1.msra.mxu0 0.0
    %572 = vmatprep.subr.mxu0 0.0
    %573 = vmatpush1.msra.mxu0 0.0
    %574 = vmatprep.subr.mxu0 0.0
    %575 = vmatpush1.msra.mxu0 0.0
    %576 = vmatprep.subr.mxu0 0.0
    %577 = vmatpush1.msra.mxu0 0.0
    %578 = vmatprep.subr.mxu0 0.0
    %579 = vmatpush1.msra.mxu0 0.0
    %580 = vmatprep.subr.mxu0 0.0
    %581 = vmatpush1.msra.mxu0 0.0
    %582 = vmatprep.subr.mxu0 0.0
    %583 = vmatpush1.msra.mxu0 0.0
    %584 = vmatprep.subr.mxu0 0.0
    %585 = vmatpush1.msra.mxu0 0.0
    %586 = vmatprep.subr.mxu0 0.0
    %587 = vmatpush1.msra.mxu0 0.0
    %588 = vmatprep.subr.mxu0 0.0
    %589 = vmatpush1.msra.mxu0 0.0
    %590 = vmatprep.subr.mxu0 0.0
    %591 = vmatpush1.msra.mxu0 0.0
    %592 = vmatprep.subr.mxu0 0.0
    %593 = vmatpush1.msra.mxu0 0.0
    %594 = vmatprep.subr.mxu0 0.0
    %595 = vmatpush1.msra.mxu0 0.0
    %596 = vmatprep.subr.mxu0 0.0
    %597 = vmatpush1.msra.mxu0 0.0
    %598 = vmatprep.subr.mxu0 0.0
    %599 = vmatpush1.msra.mxu0 0.0
    %600 = vmatprep.subr.mxu0 0.0
    %601 = vmatpush1.msra.mxu0 0.0
    %602 = vmatprep.subr.mxu0 0.0
    %603 = vmatpush1.msra.mxu0 0.0
    %604 = vmatprep.mubr.f32.mxu0 0.0
    %605 = vmatmul.mubr.f32.gmra.mrb[0].mxu0 %v538
    %v606 = vpop.f32.mrb[0].mxu0
    %v607 = vadd.f32 0.0, %v606
    %v608 = vpop.f32.mrb[0].mxu0
    %609 = vdwg.mxu0
    %v610 = vadd.f32 %v535, 0.0
    %v611 = vadd.f32 %v607, 0.0
    %v614 = vrot.slane %v611, 7
    %v615 = vsel %vm382, %v614, %v610
    %617 = vst.msk [vmem:[#allocation8] sm:$0x3] %vm164, %v615
    // Predicated region
    $region26: #{tpu_custom_call.1} parent=1 // pred_check
      _
    $region27: #{tpu_custom_call.1} parent=1 // pred_check_branch
      %619 = sbr.rel (0) target = $region29
    $region28: #{tpu_custom_call.1} parent=1 // pred_region
      %s621 = ssub.s32 32, 32
      %622 = vsyncadd [#allocation5], %s621
      %s624 = sshll.u32 [#allocation8], 4
      %s625 = int_to_ptr.vmem [resolvable:$true] %s624
      %627 = dma.vmem_to_hbm [thread:$0]  %s625, 32, %s4, [#allocation5]
    $region29: #{tpu_custom_call.1} parent=1 // pred_fallthru
      _
    // Predicated region
    $region30: #{tpu_custom_call.1} parent=1 // pred_check
      _
    $region31: #{tpu_custom_call.1} parent=1 // pred_check_branch
      %629 = sbr.rel (0) target = $region33
    $region32: #{tpu_custom_call.1} parent=1 // pred_region
      %630 = dma.done [#allocation5], 32
    $region33: #{tpu_custom_call.1} parent=1 // pred_fallthru
      _
    %631 = vsyncpa [#allocation4], 1
    %632 = vsyncpa [#allocation7], 1
    %633 = vsyncpa [#allocation5], 1

</llo_original>
